<compile_context>
chip_gen: v5e
topology: v5e:2x2
jax: 0.10.0
libtpu: 0.0.40
codegen_flags: <defaults>
</compile_context>

<pallas_src>
import jax
import jax.numpy as jnp
from jax.experimental import pallas as pl
from jax.experimental.pallas import tpu as pltpu


def _round_up(n, m):
    return ((n + m - 1) // m) * m


def _cdiv(a, b):
    return (a + b - 1) // b


def _make_kernel(tk, d_in, w1_resident, compute_dtype):
    ragged_k = (d_in % tk) != 0

    def kernel(x_ref, w1_ref, b1_ref, w2_ref, b2_ref, wc_ref, bc_ref,
               out_ref, acc_ref):
        k = pl.program_id(1)

        # Init: fold the first-layer bias directly into the f32 accumulator.
        @pl.when(k == 0)
        def _init():
            acc_ref[...] = jnp.broadcast_to(
                b1_ref[...].astype(jnp.float32), acc_ref.shape)

        # x tile: mask columns >= D_in on the ragged last K tile (garbage VMEM
        # contents could be NaN/Inf; 0 * NaN = NaN), then cast for the MXU.
        x_tile = x_ref[...]
        if ragged_k:
            col = k * tk + jax.lax.broadcasted_iota(jnp.int32, x_tile.shape, 1)
            x_tile = jnp.where(col < d_in, x_tile, 0.0)
        x_tile = x_tile.astype(compute_dtype)

        # W1 K-tile: sliced from the VMEM-resident full W1 (DMA'd once) when it
        # fits; otherwise streamed per K step by the BlockSpec.
        if w1_resident:
            start = pl.multiple_of(k * tk, 128)
            w1_tile = w1_ref[pl.ds(start, tk), :]
        else:
            w1_tile = w1_ref[...]

        # K-tiled first layer: acc += x_tile @ W1_tile (f32 accumulate on MXU).
        acc_ref[...] += jnp.dot(x_tile, w1_tile,
                                preferred_element_type=jnp.float32)

        # Finalize: LeakyReLU + layer 2 + LeakyReLU + classifier, once per tile.
        @pl.when(k == pl.num_programs(1) - 1)
        def _finalize():
            h1 = acc_ref[...]
            h1 = jnp.where(h1 > 0, h1, 0.2 * h1)                    # LeakyReLU(0.2)

            h2 = jnp.dot(h1.astype(w2_ref.dtype), w2_ref[...],
                         preferred_element_type=jnp.float32)
            h2 = h2 + b2_ref[...].astype(jnp.float32)
            h2 = jnp.where(h2 > 0, h2, 0.2 * h2)                    # LeakyReLU(0.2) -> h

            logits = jnp.dot(h2.astype(wc_ref.dtype), wc_ref[...],
                             preferred_element_type=jnp.float32)
            logits = logits + bc_ref[...].astype(jnp.float32)
            out_ref[...] = logits.astype(out_ref.dtype)

    return kernel


def sccdcg_forward(x, params, *, block_b=512, k_tile=1024,
                   compute_dtype=jnp.bfloat16):
    """x: (B, input_size). Returns logits (B, num_classes) in float32.

    compute_dtype (default bf16 on every TPU generation) is used for the
    matmul operands; accumulation, biases and activations stay float32.
    """
    w1, b1, w2, b2, wc, bc = params
    B, D_in = x.shape
    H1 = w1.shape[1]
    H2 = w2.shape[1]
    C = wc.shape[1]

    cdt = jnp.dtype(compute_dtype)
    f32 = jnp.float32

    # Tiny-batch guard: keep the batch block dim <= padded array dim.
    if B < 8:
        x = jnp.pad(x, ((0, 8 - B), (0, 0)))
    B_eff = x.shape[0]

    # Batch tile: multiple of 8; cap it so there are >=2 batch tiles whenever B
    # allows it (the "parallel" batch axis then shards across v7x's 2 TCs).
    half_b = _round_up(max(1, (B_eff + 1) // 2), 8)
    block_b = max(8, min(_round_up(block_b, 8), half_b))
    num_b = _cdiv(B_eff, block_b)

    # K (gene/reduction) tile, 128-aligned.
    tk = max(128, min(_round_up(k_tile, 128), _round_up(D_in, 128)))
    D_pad = _round_up(D_in, tk)
    num_k = D_pad // tk

    # Lane-dense hidden / classifier dims.
    H2_pad = _round_up(H2, 128)
    C_pad = _round_up(C, 128)

    # Only the (small) weights are padded/cast on the host; x is passed through
    # untouched (ragged batch/K tiles handled in-kernel), so the largest array
    # is read from HBM exactly once.
    w1p = jnp.zeros((D_pad, H1), cdt).at[:D_in, :].set(w1.astype(cdt))
    w2p = jnp.zeros((H1, H2_pad), cdt).at[:, :H2].set(w2.astype(cdt))
    wcp = jnp.zeros((H2_pad, C_pad), cdt).at[:H2, :C].set(wc.astype(cdt))
    b1p = b1.reshape(1, H1).astype(f32)
    b2p = jnp.zeros((1, H2_pad), f32).at[:, :H2].set(b2.reshape(1, H2).astype(f32))
    bcp = jnp.zeros((1, C_pad), f32).at[:, :C].set(bc.reshape(1, C).astype(f32))

    # Keep W1 fully resident in VMEM when it fits: a grid-invariant BlockSpec
    # means it is DMA'd once instead of once per batch tile.
    w1_bytes = D_pad * H1 * cdt.itemsize
    w1_resident = w1_bytes <= (16 << 20)
    if w1_resident:
        w1_spec = pl.BlockSpec((D_pad, H1), lambda i, k: (0, 0))
    else:
        w1_spec = pl.BlockSpec((tk, H1), lambda i, k: (k, 0))

    # Explicit scoped-VMEM budget (clamped to v7x's 64 MiB physical VMEM).
    x_itemsize = jnp.dtype(x.dtype).itemsize
    vmem_need = (
        (2 * w1_bytes if w1_resident else 2 * tk * H1 * cdt.itemsize)
        + 2 * block_b * tk * x_itemsize            # x double buffer
        + 2 * block_b * C_pad * 4                  # out double buffer (f32)
        + block_b * H1 * 4                         # f32 accumulator scratch
        + 2 * (H1 * H2_pad + H2_pad * C_pad) * cdt.itemsize
        + 2 * (H1 + H2_pad + C_pad) * 4
    )
    vmem_limit = int(min(max(vmem_need + (4 << 20), 32 << 20), 64 << 20))

    kernel = _make_kernel(tk, D_in, w1_resident, cdt)

    out = pl.pallas_call(
        kernel,
        out_shape=jax.ShapeDtypeStruct((B_eff, C_pad), jnp.float32),
        grid_spec=pltpu.PrefetchScalarGridSpec(
            num_scalar_prefetch=0,
            grid=(num_b, num_k),                               # k innermost (reduction)
            in_specs=[
                pl.BlockSpec((block_b, tk), lambda i, k: (i, k)),    # x tile
                w1_spec,                                             # W1 (resident or streamed)
                pl.BlockSpec((1, H1), lambda i, k: (0, 0)),          # b1 (grid-invariant)
                pl.BlockSpec((H1, H2_pad), lambda i, k: (0, 0)),     # W2 (grid-invariant)
                pl.BlockSpec((1, H2_pad), lambda i, k: (0, 0)),      # b2
                pl.BlockSpec((H2_pad, C_pad), lambda i, k: (0, 0)),  # Wc (grid-invariant)
                pl.BlockSpec((1, C_pad), lambda i, k: (0, 0)),       # bc
            ],
            out_specs=pl.BlockSpec((block_b, C_pad), lambda i, k: (i, 0)),
            scratch_shapes=[pltpu.VMEM((block_b, H1), jnp.float32)],
        ),
        compiler_params=pltpu.CompilerParams(
            dimension_semantics=("parallel", "arbitrary"),
            vmem_limit_bytes=vmem_limit),
    )(x, w1p, b1p, w2p, b2p, wcp, bcp)

    return out[:B, :C]


def init_params(key, input_size, num_classes, embedding_num=64, hidden=256):
    """Deterministic synthetic parameters (shapes match the PyTorch module)."""
    ks = jax.random.split(key, 3)

    def lin(k, fan_in, fan_out):
        # uniform(-1/sqrt(fan_in), 1/sqrt(fan_in)) like nn.Linear's default init
        bound = 1.0 / jnp.sqrt(fan_in)
        kw, kb = jax.random.split(k)
        w = jax.random.uniform(kw, (fan_in, fan_out), jnp.float32, -bound, bound)
        b = jax.random.uniform(kb, (1, fan_out), jnp.float32, -bound, bound)
        return w, b

    w1, b1 = lin(ks[0], input_size, hidden)          # Encoder[0]
    w2, b2 = lin(ks[1], hidden, embedding_num)       # Encoder[1]
    wc, bc = lin(ks[2], embedding_num, num_classes)  # classifier Linear
    return (w1, b1, w2, b2, wc, bc)


def reference_forward(x, params):
    w1, b1, w2, b2, wc, bc = params
    leaky = lambda v: jnp.where(v > 0, v, 0.2 * v)
    h = leaky(x @ w1 + b1)
    h = leaky(h @ w2 + b2)
    return h @ wc + bc


if __name__ == "__main__":
    key = jax.random.PRNGKey(0)
    # Small, deliberately non-aligned shapes: ragged last batch tile (20 rows,
    # 16-row block), ragged last K tile (200 genes, 128-col K tile), H2=64 and
    # num_classes=10 exercising the lane-dense padding.
    B, INPUT, CLASSES, EMB, HID = 20, 200, 10, 64, 256

    kx, kp = jax.random.split(key)
    x = jax.random.normal(kx, (B, INPUT), jnp.float32)
    params = init_params(kp, INPUT, CLASSES, embedding_num=EMB, hidden=HID)

    ref = reference_forward(x, params)

    # f32 matmul path; k_tile=128 forces 2 reduction steps (accumulator path).
    logits = sccdcg_forward(x, params, k_tile=128, compute_dtype=jnp.float32)
    logits = jax.block_until_ready(logits)
    assert logits.shape == (B, CLASSES)
    assert jnp.allclose(logits, ref, atol=2e-3, rtol=2e-3), \
        float(jnp.max(jnp.abs(logits - ref)))

    # Default bf16 matmul path (f32 accumulate) — looser tolerance as documented.
    logits_bf16 = sccdcg_forward(x, params, k_tile=128)
    logits_bf16 = jax.block_until_ready(logits_bf16)
    assert logits_bf16.shape == (B, CLASSES)
    assert jnp.allclose(logits_bf16, ref, atol=1.5e-1, rtol=5e-2), \
        float(jnp.max(jnp.abs(logits_bf16 - ref)))

    print("KERNEL_OK")
</pallas_src>

<mosaic_0001>
module attributes {stable_mosaic.version = 11 : i64} {
  func.func @kernel(%arg0: i32, %arg1: i32, %arg2: memref<16x128xf32, #tpu.memory_space<vmem>>, %arg3: memref<256x256xf32, #tpu.memory_space<vmem>>, %arg4: memref<1x256xf32, #tpu.memory_space<vmem>>, %arg5: memref<256x128xf32, #tpu.memory_space<vmem>>, %arg6: memref<1x128xf32, #tpu.memory_space<vmem>>, %arg7: memref<128x128xf32, #tpu.memory_space<vmem>>, %arg8: memref<1x128xf32, #tpu.memory_space<vmem>>, %arg9: memref<16x128xf32, #tpu.memory_space<vmem>>, %arg10: memref<16x256xf32, #tpu.memory_space<vmem>>) attributes {dimension_semantics = [#tpu.dimension_semantics<parallel>, #tpu.dimension_semantics<arbitrary>], iteration_bounds = array<i64: 2, 2>, scalar_prefetch = 0 : i64, scratch_operands = 1 : i64, tpu.core_type = #tpu.core_type<tc>, window_params = [{transform_indices = @transform_0, window_bounds = array<i64: 16, 128>}, {pipeline_mode = #tpu.pipeline_mode<synchronous>, transform_indices = @transform_1, window_bounds = array<i64: 256, 256>}, {pipeline_mode = #tpu.pipeline_mode<synchronous>, transform_indices = @transform_2, window_bounds = array<i64: 1, 256>}, {pipeline_mode = #tpu.pipeline_mode<synchronous>, transform_indices = @transform_3, window_bounds = array<i64: 256, 128>}, {pipeline_mode = #tpu.pipeline_mode<synchronous>, transform_indices = @transform_4, window_bounds = array<i64: 1, 128>}, {pipeline_mode = #tpu.pipeline_mode<synchronous>, transform_indices = @transform_5, window_bounds = array<i64: 128, 128>}, {pipeline_mode = #tpu.pipeline_mode<synchronous>, transform_indices = @transform_6, window_bounds = array<i64: 1, 128>}, {transform_indices = @transform_7, window_bounds = array<i64: 16, 128>}]} {
    %c0_i32 = arith.constant 0 : i32
    %0 = arith.cmpi eq, %arg1, %c0_i32 : i32
    %1 = arith.extui %0 : i1 to i32
    %c0_i32_0 = arith.constant 0 : i32
    %2 = arith.cmpi ne, %1, %c0_i32_0 : i32
    scf.if %2 {
      %c0_10 = arith.constant 0 : index
      %c0_11 = arith.constant 0 : index
      %23 = vector.load %arg4[%c0_10, %c0_11] : memref<1x256xf32, #tpu.memory_space<vmem>>, vector<1x256xf32>
      %24 = vector.shape_cast %23 : vector<1x256xf32> to vector<1x256xf32>
      %25 = vector.broadcast %24 : vector<1x256xf32> to vector<16x256xf32>
      %c0_12 = arith.constant 0 : index
      %c0_13 = arith.constant 0 : index
      %26 = vector.load %arg10[%c0_12, %c0_13] : memref<16x256xf32, #tpu.memory_space<vmem>>, vector<16x256xf32>
      tpu.vector_store %arg10[%c0_12, %c0_13], %25 {strides = array<i32>} : memref<16x256xf32, #tpu.memory_space<vmem>>, vector<16x256xf32>,
    } else {
    }
    %c0 = arith.constant 0 : index
    %c0_1 = arith.constant 0 : index
    %3 = vector.load %arg2[%c0, %c0_1] : memref<16x128xf32, #tpu.memory_space<vmem>>, vector<16x128xf32>
    %c128_i32 = arith.constant 128 : i32
    %4 = arith.muli %arg1, %c128_i32 : i32
    %5 = tpu.iota {dimensions = array<i32: 1>} : vector<16x128xi32>
    %6 = vector.broadcast %4 : i32 to vector<16x128xi32>
    %7 = arith.addi %6, %5 : vector<16x128xi32>
    %c200_i32 = arith.constant 200 : i32
    %8 = vector.broadcast %c200_i32 : i32 to vector<16x128xi32>
    %9 = arith.cmpi slt, %7, %8 : vector<16x128xi32>
    %cst = arith.constant 0.000000e+00 : f32
    %10 = vector.broadcast %cst : f32 to vector<16x128xf32>
    %11 = arith.select %9, %3, %10 : vector<16x128xi1>, vector<16x128xf32>
    %c128_i32_2 = arith.constant 128 : i32
    %12 = arith.muli %arg1, %c128_i32_2 : i32
    %13 = tpu.assume_multiple %12, 128 : i32
    %14 = arith.index_cast %13 : i32 to index
    %c0_3 = arith.constant 0 : index
    %15 = vector.load %arg3[%14, %c0_3] : memref<256x256xf32, #tpu.memory_space<vmem>>, vector<128x256xf32>
    %c0_4 = arith.constant 0 : index
    %c0_5 = arith.constant 0 : index
    %16 = vector.load %arg10[%c0_4, %c0_5] : memref<16x256xf32, #tpu.memory_space<vmem>>, vector<16x256xf32>
    %cst_6 = arith.constant dense<0.000000e+00> : vector<16x256xf32>
    %17 = tpu.matmul %11, %15, %cst_6 {dimension_numbers = #tpu.dot_dimension_numbers<[1], [0], [0], [1], [0, 0, 1, 1], [], []>} : vector<16x128xf32>, vector<128x256xf32>, vector<16x256xf32> -> vector<16x256xf32>
    %18 = arith.addf %16, %17 : vector<16x256xf32>
    %c0_7 = arith.constant 0 : index
    %c0_8 = arith.constant 0 : index
    %19 = vector.load %arg10[%c0_7, %c0_8] : memref<16x256xf32, #tpu.memory_space<vmem>>, vector<16x256xf32>
    tpu.vector_store %arg10[%c0_7, %c0_8], %18 {strides = array<i32>} : memref<16x256xf32, #tpu.memory_space<vmem>>, vector<16x256xf32>,
    %c1_i32 = arith.constant 1 : i32
    %20 = arith.cmpi eq, %arg1, %c1_i32 : i32
    %21 = arith.extui %20 : i1 to i32
    %c0_i32_9 = arith.constant 0 : i32
    %22 = arith.cmpi ne, %21, %c0_i32_9 : i32
    scf.if %22 {
      %c0_10 = arith.constant 0 : index
      %c0_11 = arith.constant 0 : index
      %23 = vector.load %arg10[%c0_10, %c0_11] : memref<16x256xf32, #tpu.memory_space<vmem>>, vector<16x256xf32>
      %cst_12 = arith.constant 0.000000e+00 : f32
      %24 = vector.broadcast %cst_12 : f32 to vector<16x256xf32>
      %25 = arith.cmpf ogt, %23, %24 : vector<16x256xf32>
      %cst_13 = arith.constant 2.000000e-01 : f32
      %26 = vector.broadcast %cst_13 : f32 to vector<16x256xf32>
      %27 = arith.mulf %26, %23 : vector<16x256xf32>
      %28 = arith.select %25, %23, %27 : vector<16x256xi1>, vector<16x256xf32>
      %c0_14 = arith.constant 0 : index
      %c0_15 = arith.constant 0 : index
      %29 = vector.load %arg5[%c0_14, %c0_15] : memref<256x128xf32, #tpu.memory_space<vmem>>, vector<256x128xf32>
      %cst_16 = arith.constant dense<0.000000e+00> : vector<16x128xf32>
      %30 = tpu.matmul %28, %29, %cst_16 {dimension_numbers = #tpu.dot_dimension_numbers<[1], [0], [0], [1], [0, 0, 1, 1], [], []>} : vector<16x256xf32>, vector<256x128xf32>, vector<16x128xf32> -> vector<16x128xf32>
      %c0_17 = arith.constant 0 : index
      %c0_18 = arith.constant 0 : index
      %31 = vector.load %arg6[%c0_17, %c0_18] : memref<1x128xf32, #tpu.memory_space<vmem>>, vector<1x128xf32>
      %32 = vector.broadcast %31 : vector<1x128xf32> to vector<16x128xf32>
      %33 = arith.addf %30, %32 : vector<16x128xf32>
      %cst_19 = arith.constant 0.000000e+00 : f32
      %34 = vector.broadcast %cst_19 : f32 to vector<16x128xf32>
      %35 = arith.cmpf ogt, %33, %34 : vector<16x128xf32>
      %cst_20 = arith.constant 2.000000e-01 : f32
      %36 = vector.broadcast %cst_20 : f32 to vector<16x128xf32>
      %37 = arith.mulf %36, %33 : vector<16x128xf32>
      %38 = arith.select %35, %33, %37 : vector<16x128xi1>, vector<16x128xf32>
      %c0_21 = arith.constant 0 : index
      %c0_22 = arith.constant 0 : index
      %39 = vector.load %arg7[%c0_21, %c0_22] : memref<128x128xf32, #tpu.memory_space<vmem>>, vector<128x128xf32>
      %cst_23 = arith.constant dense<0.000000e+00> : vector<16x128xf32>
      %40 = tpu.matmul %38, %39, %cst_23 {dimension_numbers = #tpu.dot_dimension_numbers<[1], [0], [0], [1], [0, 0, 1, 1], [], []>} : vector<16x128xf32>, vector<128x128xf32>, vector<16x128xf32> -> vector<16x128xf32>
      %c0_24 = arith.constant 0 : index
      %c0_25 = arith.constant 0 : index
      %41 = vector.load %arg8[%c0_24, %c0_25] : memref<1x128xf32, #tpu.memory_space<vmem>>, vector<1x128xf32>
      %42 = vector.broadcast %41 : vector<1x128xf32> to vector<16x128xf32>
      %43 = arith.addf %40, %42 : vector<16x128xf32>
      %c0_26 = arith.constant 0 : index
      %c0_27 = arith.constant 0 : index
      %44 = vector.load %arg9[%c0_26, %c0_27] : memref<16x128xf32, #tpu.memory_space<vmem>>, vector<16x128xf32>
      tpu.vector_store %arg9[%c0_26, %c0_27], %43 {strides = array<i32>} : memref<16x128xf32, #tpu.memory_space<vmem>>, vector<16x128xf32>,
    } else {
    }
    return
  }
  func.func @transform_0(%arg0: i32, %arg1: i32) -> (i32, i32) {
    %c0_i32 = arith.constant 0 : i32
    return %arg0, %arg1 : i32, i32
  }
  func.func @transform_1(%arg0: i32, %arg1: i32) -> (i32, i32) {
    %c0_i32 = arith.constant 0 : i32
    %c0_i32_0 = arith.constant 0 : i32
    %c0_i32_1 = arith.constant 0 : i32
    return %c0_i32, %c0_i32_0 : i32, i32
  }
  func.func @transform_2(%arg0: i32, %arg1: i32) -> (i32, i32) {
    %c0_i32 = arith.constant 0 : i32
    %c0_i32_0 = arith.constant 0 : i32
    %c0_i32_1 = arith.constant 0 : i32
    return %c0_i32, %c0_i32_0 : i32, i32
  }
  func.func @transform_3(%arg0: i32, %arg1: i32) -> (i32, i32) {
    %c0_i32 = arith.constant 0 : i32
    %c0_i32_0 = arith.constant 0 : i32
    %c0_i32_1 = arith.constant 0 : i32
    return %c0_i32, %c0_i32_0 : i32, i32
  }
  func.func @transform_4(%arg0: i32, %arg1: i32) -> (i32, i32) {
    %c0_i32 = arith.constant 0 : i32
    %c0_i32_0 = arith.constant 0 : i32
    %c0_i32_1 = arith.constant 0 : i32
    return %c0_i32, %c0_i32_0 : i32, i32
  }
  func.func @transform_5(%arg0: i32, %arg1: i32) -> (i32, i32) {
    %c0_i32 = arith.constant 0 : i32
    %c0_i32_0 = arith.constant 0 : i32
    %c0_i32_1 = arith.constant 0 : i32
    return %c0_i32, %c0_i32_0 : i32, i32
  }
  func.func @transform_6(%arg0: i32, %arg1: i32) -> (i32, i32) {
    %c0_i32 = arith.constant 0 : i32
    %c0_i32_0 = arith.constant 0 : i32
    %c0_i32_1 = arith.constant 0 : i32
    return %c0_i32, %c0_i32_0 : i32, i32
  }
  func.func @transform_7(%arg0: i32, %arg1: i32) -> (i32, i32) {
    %c0_i32 = arith.constant 0 : i32
    %c0_i32_0 = arith.constant 0 : i32
    return %arg0, %c0_i32 : i32, i32
  }
}

</mosaic_0001>

<llo_original>
// kernel: tpu_custom_call.1
$region0: #{tpu_custom_call.1}
  #allocation0 [shape = 'u32[]', space=smem, size = 0x4, offset = 0x4, fixed_abs, tag = 'smem constant byte address 0x4 - core index']
  #allocation1 [shape = 'u32[72,128]{1,0:T(1,128)}', space=vmem, size = 0x9000, scoped, tag = 'internal scratch']
  #allocation2 [shape = 'f32[16,256]{1,0:T(8,128)}', space=vmem, size = 0x4000, scoped, tag = 'scratch operand']
  %s0 = inlined_call_operand.hbm [shape: f32[20,200], index: 0, kind: input, shape index: {}]
  %s1 = inlined_call_operand.hbm [shape: f32[256,256], index: 1, kind: input, shape index: {}]
  %s2 = inlined_call_operand.hbm [shape: f32[1,256], index: 2, kind: input, shape index: {}]
  %s3 = inlined_call_operand.hbm [shape: f32[256,128], index: 3, kind: input, shape index: {}]
  %s4 = inlined_call_operand.vmem [shape: f32[1,128], index: 4, kind: input, shape index: {}]
  %s5 = inlined_call_operand.hbm [shape: f32[128,128], index: 5, kind: input, shape index: {}]
  %s6 = inlined_call_operand.vmem [shape: f32[1,128], index: 6, kind: input, shape index: {}]
  %s7 = inlined_call_operand.hbm [shape: f32[20,128], index: 7, kind: output, shape index: {}]
  %s8 = sld [smem:[#allocation0]]
  $region89: #{tpu_custom_call.1} parent=0
    _
  %s10 = ssub.s32 1, %s8
  %s11 = scalar_select 0, %s10, %s8
  $region1: #{tpu_custom_call.1} parent=0
    #allocation3 [shape = 'u8[16384]{0}', space=vmem, size = 0x4000, scoped, tag = 'input window, operand 0']
    #allocation4 [shape = 's32[2]{0}', space=sflag, size = 0x8, scoped, tag = 'scoped memory for tpu_custom_call.1']
    #allocation5 [shape = 's32[2]{0}', space=sflag, size = 0x8, scoped, tag = 'scoped memory for tpu_custom_call.1']
    #allocation6 [shape = 'u8[262144]{0}', space=vmem, size = 0x40000, scoped, tag = 'input window, operand 1, single buffered']
    #allocation7 [shape = 's32[1]{0}', space=sflag, size = 0x4, scoped, tag = 'scoped memory for tpu_custom_call.1']
    #allocation8 [shape = 'u8[1024]{0}', space=vmem, size = 0x400, scoped, tag = 'input window, operand 2, single buffered']
    #allocation9 [shape = 'u8[131072]{0}', space=vmem, size = 0x20000, scoped, tag = 'input window, operand 3, single buffered']
    #allocation10 [shape = 's32[1]{0}', space=sflag, size = 0x4, scoped, tag = 'scoped memory for tpu_custom_call.1']
    #allocation11 [shape = 'u8[65536]{0}', space=vmem, size = 0x10000, scoped, tag = 'input window, operand 5, single buffered']
    #allocation12 [shape = 'u8[16384]{0}', space=vmem, size = 0x4000, scoped, tag = 'output window, operand 0']
    %12 = vsyncpa [#allocation4], 0
    %s13 = scalar_lea.sflag [#allocation4], 1
    %14 = vsyncpa %s13, 0
    %15 = vsyncpa [#allocation7], 0
    %16 = vsyncpa [#allocation10], 0
    %17 = vsyncpa [#allocation5], 0
    %s18 = scalar_lea.sflag [#allocation5], 1
    %19 = vsyncpa %s18, 0
    loop: start=0, step=1, limit=6
    $region2: #{tpu_custom_call.1} parent=1 // loop_pre_header
      _
    $region3: #{tpu_custom_call.1} parent=1 // loop_header
      %s21 = sphi 0, %s25
      %p22 = scmp.ge.s32.totalorder %s21, 6
      %s28 = sphi 0, %s40
      %s29 = sphi 0, %s36
      %s30 = sphi 0, %s28
      %s31 = sphi 0, %s29
      %s32 = sphi 0, %s30
      %s33 = sphi 0, %s31
      %s45 = sphi 0, %s47
      %s48 = sphi 0, %s45
      %s49 = sphi 0, %s48
      %s65 = sphi 0, %s49
      %s69 = sphi 0, %s69
      %s71 = sphi 0, %s69
      %s72 = sphi 0, %s71
      %s86 = sphi 0, %s72
      %s90 = sphi 0, %s90
      %s92 = sphi 0, %s90
      %s93 = sphi 0, %s92
      %s107 = sphi 0, %s93
      %s111 = sphi 0, %s111
      %s113 = sphi 0, %s111
      %s114 = sphi 0, %s113
      %s128 = sphi 0, %s114
      %s132 = sphi 0, %s132
      %s134 = sphi 0, %s132
      %s135 = sphi 0, %s134
      %s149 = sphi 0, %s135
      %s153 = sphi 0, %s153
      %s155 = sphi 0, %s153
      %s156 = sphi 0, %s155
      %s170 = sphi 0, %s156
      %s174 = sphi 0, %s174
      %s176 = sphi 0, %s174
      %s177 = sphi 0, %s176
      %s191 = sphi 0, %s177
      %s197 = sphi 0, %s199
      %s200 = sphi 0, %s197
      %s201 = sphi 0, %s200
      %s217 = sphi 0, %s201
    $region4: #{tpu_custom_call.1} parent=1 // loop_header_branch
      %24 = sbr.rel (%p22) target = $region8
    $region5: #{tpu_custom_call.1} parent=1 // loop_body
      %s26 = ssub.s32 %s21, 1
      %s27 = ssub.s32 %s21, 2
      %s34 = sadd.s32 1, %s29
      %p35 = scmp.ge.s32.totalorder %s34, 2
      %s36 = scalar_select %p35, 0, %s34
      %s37 = sadd.s32 1, %s28
      %s38 = scalar_select %p35, %s37, %s28
      %p39 = scmp.ge.s32.totalorder %s38, 2
      %s40 = scalar_select %p39, 0, %s38
      %s41 = ssub.s32 %s28, %s40
      %s42 = ssub.s32 %s29, %s36
      %s43 = sor.u32 %s41, %s42
      %p44 = scmp.eq.s32.totalorder %s43, 0
      %s46 = sadd.s32 %s45, 1
      %s47 = scalar_select %p44, %s45, %s46
      %p50 = pneg %p44
      %p51 = scmp.eq.s32.totalorder %s21, 3
      %p52 = por %p50, %p51
      %p53 = scmp.ne.s32.totalorder %s45, %s48
      %p54 = scmp.eq.s32.totalorder %s21, 0
      %p55 = por %p53, %p54
      %p56 = scmp.ne.s32.totalorder %s45, %s48
      %p57 = scmp.eq.s32.totalorder %s26, 3
      %p58 = por %p56, %p57
      %p59 = scmp.ne.s32.totalorder %s48, %s49
      %p60 = scmp.eq.s32.totalorder %s26, 0
      %p61 = por %p59, %p60
      %p62 = scmp.ne.s32.totalorder %s48, %s49
      %p63 = scmp.eq.s32.totalorder %s27, 3
      %p64 = por %p62, %p63
      %p66 = scmp.ne.s32.totalorder %s49, %s65
      %p67 = scmp.eq.s32.totalorder %s27, 0
      %p68 = por %p66, %p67
      %s70 = sadd.s32 %s69, 1
      %p73 = scmp.eq.s32.totalorder %s21, 3
      %p74 = scmp.ne.s32.totalorder %s69, %s71
      %p75 = scmp.eq.s32.totalorder %s21, 0
      %p76 = por %p74, %p75
      %p77 = scmp.ne.s32.totalorder %s69, %s71
      %p78 = scmp.eq.s32.totalorder %s26, 3
      %p79 = por %p77, %p78
      %p80 = scmp.ne.s32.totalorder %s71, %s72
      %p81 = scmp.eq.s32.totalorder %s26, 0
      %p82 = por %p80, %p81
      %p83 = scmp.ne.s32.totalorder %s71, %s72
      %p84 = scmp.eq.s32.totalorder %s27, 3
      %p85 = por %p83, %p84
      %p87 = scmp.ne.s32.totalorder %s72, %s86
      %p88 = scmp.eq.s32.totalorder %s27, 0
      %p89 = por %p87, %p88
      %s91 = sadd.s32 %s90, 1
      %p94 = scmp.eq.s32.totalorder %s21, 3
      %p95 = scmp.ne.s32.totalorder %s90, %s92
      %p96 = scmp.eq.s32.totalorder %s21, 0
      %p97 = por %p95, %p96
      %p98 = scmp.ne.s32.totalorder %s90, %s92
      %p99 = scmp.eq.s32.totalorder %s26, 3
      %p100 = por %p98, %p99
      %p101 = scmp.ne.s32.totalorder %s92, %s93
      %p102 = scmp.eq.s32.totalorder %s26, 0
      %p103 = por %p101, %p102
      %p104 = scmp.ne.s32.totalorder %s92, %s93
      %p105 = scmp.eq.s32.totalorder %s27, 3
      %p106 = por %p104, %p105
      %p108 = scmp.ne.s32.totalorder %s93, %s107
      %p109 = scmp.eq.s32.totalorder %s27, 0
      %p110 = por %p108, %p109
      %s112 = sadd.s32 %s111, 1
      %p115 = scmp.eq.s32.totalorder %s21, 3
      %p116 = scmp.ne.s32.totalorder %s111, %s113
      %p117 = scmp.eq.s32.totalorder %s21, 0
      %p118 = por %p116, %p117
      %p119 = scmp.ne.s32.totalorder %s111, %s113
      %p120 = scmp.eq.s32.totalorder %s26, 3
      %p121 = por %p119, %p120
      %p122 = scmp.ne.s32.totalorder %s113, %s114
      %p123 = scmp.eq.s32.totalorder %s26, 0
      %p124 = por %p122, %p123
      %p125 = scmp.ne.s32.totalorder %s113, %s114
      %p126 = scmp.eq.s32.totalorder %s27, 3
      %p127 = por %p125, %p126
      %p129 = scmp.ne.s32.totalorder %s114, %s128
      %p130 = scmp.eq.s32.totalorder %s27, 0
      %p131 = por %p129, %p130
      %s133 = sadd.s32 %s132, 1
      %p136 = scmp.eq.s32.totalorder %s21, 3
      %p137 = scmp.ne.s32.totalorder %s132, %s134
      %p138 = scmp.eq.s32.totalorder %s21, 0
      %p139 = por %p137, %p138
      %p140 = scmp.ne.s32.totalorder %s132, %s134
      %p141 = scmp.eq.s32.totalorder %s26, 3
      %p142 = por %p140, %p141
      %p143 = scmp.ne.s32.totalorder %s134, %s135
      %p144 = scmp.eq.s32.totalorder %s26, 0
      %p145 = por %p143, %p144
      %p146 = scmp.ne.s32.totalorder %s134, %s135
      %p147 = scmp.eq.s32.totalorder %s27, 3
      %p148 = por %p146, %p147
      %p150 = scmp.ne.s32.totalorder %s135, %s149
      %p151 = scmp.eq.s32.totalorder %s27, 0
      %p152 = por %p150, %p151
      %s154 = sadd.s32 %s153, 1
      %p157 = scmp.eq.s32.totalorder %s21, 3
      %p158 = scmp.ne.s32.totalorder %s153, %s155
      %p159 = scmp.eq.s32.totalorder %s21, 0
      %p160 = por %p158, %p159
      %p161 = scmp.ne.s32.totalorder %s153, %s155
      %p162 = scmp.eq.s32.totalorder %s26, 3
      %p163 = por %p161, %p162
      %p164 = scmp.ne.s32.totalorder %s155, %s156
      %p165 = scmp.eq.s32.totalorder %s26, 0
      %p166 = por %p164, %p165
      %p167 = scmp.ne.s32.totalorder %s155, %s156
      %p168 = scmp.eq.s32.totalorder %s27, 3
      %p169 = por %p167, %p168
      %p171 = scmp.ne.s32.totalorder %s156, %s170
      %p172 = scmp.eq.s32.totalorder %s27, 0
      %p173 = por %p171, %p172
      %s175 = sadd.s32 %s174, 1
      %p178 = scmp.eq.s32.totalorder %s21, 3
      %p179 = scmp.ne.s32.totalorder %s174, %s176
      %p180 = scmp.eq.s32.totalorder %s21, 0
      %p181 = por %p179, %p180
      %p182 = scmp.ne.s32.totalorder %s174, %s176
      %p183 = scmp.eq.s32.totalorder %s26, 3
      %p184 = por %p182, %p183
      %p185 = scmp.ne.s32.totalorder %s176, %s177
      %p186 = scmp.eq.s32.totalorder %s26, 0
      %p187 = por %p185, %p186
      %p188 = scmp.ne.s32.totalorder %s176, %s177
      %p189 = scmp.eq.s32.totalorder %s27, 3
      %p190 = por %p188, %p189
      %p192 = scmp.ne.s32.totalorder %s177, %s191
      %p193 = scmp.eq.s32.totalorder %s27, 0
      %p194 = por %p192, %p193
      %s195 = ssub.s32 %s28, %s40
      %p196 = scmp.eq.s32.totalorder %s195, 0
      %s198 = sadd.s32 %s197, 1
      %s199 = scalar_select %p196, %s197, %s198
      %p202 = pneg %p196
      %p203 = scmp.eq.s32.totalorder %s21, 3
      %p204 = por %p202, %p203
      %p205 = scmp.ne.s32.totalorder %s197, %s200
      %p206 = scmp.eq.s32.totalorder %s21, 0
      %p207 = por %p205, %p206
      %p208 = scmp.ne.s32.totalorder %s197, %s200
      %p209 = scmp.eq.s32.totalorder %s26, 3
      %p210 = por %p208, %p209
      %p211 = scmp.ne.s32.totalorder %s200, %s201
      %p212 = scmp.eq.s32.totalorder %s26, 0
      %p213 = por %p211, %p212
      %p214 = scmp.ne.s32.totalorder %s200, %s201
      %p215 = scmp.eq.s32.totalorder %s27, 3
      %p216 = por %p214, %p215
      %p218 = scmp.ne.s32.totalorder %s201, %s217
      %p219 = scmp.eq.s32.totalorder %s27, 0
      %p220 = por %p218, %p219
      %p221 = scmp.le.s32.totalorder 1, %s21
      %p222 = scmp.lt.s32.totalorder %s21, 5
      %p223 = pnand %p221, %p222
      %p224 = pneg %p223
      // Predicated region
      $region9: #{tpu_custom_call.1} parent=5 // pred_check
        _
      $region10: #{tpu_custom_call.1} parent=5 // pred_check_branch
        %226 = sbr.rel (%p223) target = $region12
      $region11: #{tpu_custom_call.1} parent=5 // pred_region
        %s227 = ssub.s32 %s21, 1
        // Predicated region
        $region13: #{tpu_custom_call.1} parent=11 // pred_check
          %p228 = pneg %p82
        $region14: #{tpu_custom_call.1} parent=11 // pred_check_branch
          %230 = sbr.rel (%p228) target = $region16
        $region15: #{tpu_custom_call.1} parent=11 // pred_region
          %232 = vsyncadd [#allocation7], 0
          %s233 = sshll.u32 %s1, 4
          %s234 = int_to_ptr.hbm [resolvable:$true] %s233
          %s235 = sshll.u32 [#allocation6], 4
          %s236 = int_to_ptr.vmem [resolvable:$true] %s235
          %241 = dma.hbm_to_vmem [thread:$0]  %s234, 8192, %s236, [#allocation7], 256, 256, 16
        $region16: #{tpu_custom_call.1} parent=11 // pred_fallthru
          _
        // Predicated region
        $region17: #{tpu_custom_call.1} parent=11 // pred_check
          %p242 = pneg %p103
        $region18: #{tpu_custom_call.1} parent=11 // pred_check_branch
          %244 = sbr.rel (%p242) target = $region20
        $region19: #{tpu_custom_call.1} parent=11 // pred_region
          %246 = vsyncadd [#allocation7], 0
          %s248 = sshll.u32 %s2, 4
          %s249 = int_to_ptr.hbm [resolvable:$true] %s248
          %s250 = sshll.u32 [#allocation8], 4
          %s251 = int_to_ptr.vmem [resolvable:$true] %s250
          %253 = dma.hbm_to_vmem [thread:$0]  %s249, 32, %s251, [#allocation7]
        $region20: #{tpu_custom_call.1} parent=11 // pred_fallthru
          _
        // Predicated region
        $region21: #{tpu_custom_call.1} parent=11 // pred_check
          %p254 = pneg %p124
        $region22: #{tpu_custom_call.1} parent=11 // pred_check_branch
          %256 = sbr.rel (%p254) target = $region24
        $region23: #{tpu_custom_call.1} parent=11 // pred_region
          %258 = vsyncadd [#allocation10], 0
          %s259 = sshll.u32 %s3, 4
          %s260 = int_to_ptr.hbm [resolvable:$true] %s259
          %s261 = sshll.u32 [#allocation9], 4
          %s262 = int_to_ptr.vmem [resolvable:$true] %s261
          %267 = dma.hbm_to_vmem [thread:$0]  %s260, 4096, %s262, [#allocation10], 128, 128, 8
        $region24: #{tpu_custom_call.1} parent=11 // pred_fallthru
          _
        // Predicated region
        $region25: #{tpu_custom_call.1} parent=11 // pred_check
          %p268 = pneg %p145
        $region26: #{tpu_custom_call.1} parent=11 // pred_check_branch
          %270 = sbr.rel (%p268) target = $region28
        $region27: #{tpu_custom_call.1} parent=11 // pred_region
          _
        $region28: #{tpu_custom_call.1} parent=11 // pred_fallthru
          _
        // Predicated region
        $region29: #{tpu_custom_call.1} parent=11 // pred_check
          %p271 = pneg %p166
        $region30: #{tpu_custom_call.1} parent=11 // pred_check_branch
          %273 = sbr.rel (%p271) target = $region32
        $region31: #{tpu_custom_call.1} parent=11 // pred_region
          %275 = vsyncadd [#allocation10], 0
          %s276 = sshll.u32 %s5, 4
          %s277 = int_to_ptr.hbm [resolvable:$true] %s276
          %s278 = sshll.u32 [#allocation11], 4
          %s279 = int_to_ptr.vmem [resolvable:$true] %s278
          %284 = dma.hbm_to_vmem [thread:$0]  %s277, 2048, %s279, [#allocation10], 128, 128, 8
        $region32: #{tpu_custom_call.1} parent=11 // pred_fallthru
          _
        // Predicated region
        $region33: #{tpu_custom_call.1} parent=11 // pred_check
          %p285 = pneg %p187
        $region34: #{tpu_custom_call.1} parent=11 // pred_check_branch
          %287 = sbr.rel (%p285) target = $region36
        $region35: #{tpu_custom_call.1} parent=11 // pred_region
          _
        $region36: #{tpu_custom_call.1} parent=11 // pred_fallthru
          _
      $region12: #{tpu_custom_call.1} parent=5 // pred_fallthru
        _
      %p288 = scmp.lt.s32.totalorder %s21, 4
      // Predicated region
      $region37: #{tpu_custom_call.1} parent=5 // pred_check
        %p289 = pneg %p288
      $region38: #{tpu_custom_call.1} parent=5 // pred_check_branch
        %291 = sbr.rel (%p289) target = $region40
      $region39: #{tpu_custom_call.1} parent=5 // pred_region
        // Predicated region
        $region41: #{tpu_custom_call.1} parent=39 // pred_check
          %p292 = pneg %p55
        $region42: #{tpu_custom_call.1} parent=39 // pred_check_branch
          %294 = sbr.rel (%p292) target = $region44
        $region43: #{tpu_custom_call.1} parent=39 // pred_region
          %s295 = sand.u32 %s45, 1
          %s296 = scalar_lea.sflag [#allocation4], %s295
          %s297 = sand.u32 %s45, 1
          %s298 = smul.addr %s297, 16
          %s299 = scalar_lea.vmem [#allocation3], %s298
          %s300 = smul.u32 2, %s28
          %s301 = ssub.s32 3, %s300
          %p302 = scmp.lt.s32.totalorder %s301, 2
          %s303 = scalar_select %p302, %s301, 2
          %s304 = smul.u32 8, %s303
          %s305 = ssub.s32 16, %s304
          %s306 = sshll.u32 %s305, 4
          %307 = vsyncadd %s296, %s306
          %p308 = scmp.ne.s32.totalorder 0, %s304
          %s309 = smul.addr %s300, 2
          %s310 = sadd.s32 %s29, %s309
          %s311 = smul.addr %s310, 8
          %s312 = scalar_lea.hbm %s0, %s311
          %s313 = smul.u32 8, %s303
          %s314 = sshll.u32 %s312, 4
          %s315 = int_to_ptr.hbm [resolvable:$true] %s314
          %s316 = sshll.u32 %s299, 4
          %s317 = int_to_ptr.vmem [resolvable:$true] %s316
          %s318 = sshll.u32 %s313, 4
          %322 = dma.hbm_to_vmem [thread:$0]  (%p308), %s315, %s318, %s317, %s296, 256, 128, 8
        $region44: #{tpu_custom_call.1} parent=39 // pred_fallthru
          _
      $region40: #{tpu_custom_call.1} parent=5 // pred_fallthru
        _
      %p323 = scmp.le.s32.totalorder 1, %s21
      %p324 = scmp.lt.s32.totalorder %s21, 5
      %p325 = pnand %p323, %p324
      %p326 = pneg %p325
      // Predicated region
      $region45: #{tpu_custom_call.1} parent=5 // pred_check
        _
      $region46: #{tpu_custom_call.1} parent=5 // pred_check_branch
        %328 = sbr.rel (%p325) target = $region48
      $region47: #{tpu_custom_call.1} parent=5 // pred_region
        %s329 = ssub.s32 %s21, 1
        %s330 = sand.u32 %s48, 1
        %s331 = scalar_lea.sflag [#allocation4], %s330
        %s332 = sand.u32 %s48, 1
        %s333 = smul.addr %s332, 16
        %s334 = scalar_lea.vmem [#allocation3], %s333
        // Predicated region
        $region49: #{tpu_custom_call.1} parent=47 // pred_check
          %p335 = pneg %p61
        $region50: #{tpu_custom_call.1} parent=47 // pred_check_branch
          %337 = sbr.rel (%p335) target = $region52
        $region51: #{tpu_custom_call.1} parent=47 // pred_region
          %339 = dma.done %s331, 256
        $region52: #{tpu_custom_call.1} parent=47 // pred_fallthru
          _
        // Predicated region
        $region53: #{tpu_custom_call.1} parent=47 // pred_check
          %p340 = pneg %p82
        $region54: #{tpu_custom_call.1} parent=47 // pred_check_branch
          %342 = sbr.rel (%p340) target = $region56
        $region55: #{tpu_custom_call.1} parent=47 // pred_region
          %344 = dma.done [#allocation7], 8192
        $region56: #{tpu_custom_call.1} parent=47 // pred_fallthru
          _
        // Predicated region
        $region57: #{tpu_custom_call.1} parent=47 // pred_check
          %p345 = pneg %p103
        $region58: #{tpu_custom_call.1} parent=47 // pred_check_branch
          %347 = sbr.rel (%p345) target = $region60
        $region59: #{tpu_custom_call.1} parent=47 // pred_region
          %349 = dma.done [#allocation7], 32
        $region60: #{tpu_custom_call.1} parent=47 // pred_fallthru
          _
        // Predicated region
        $region61: #{tpu_custom_call.1} parent=47 // pred_check
          %p350 = pneg %p124
        $region62: #{tpu_custom_call.1} parent=47 // pred_check_branch
          %352 = sbr.rel (%p350) target = $region64
        $region63: #{tpu_custom_call.1} parent=47 // pred_region
          %354 = dma.done [#allocation10], 4096
        $region64: #{tpu_custom_call.1} parent=47 // pred_fallthru
          _
        // Predicated region
        $region65: #{tpu_custom_call.1} parent=47 // pred_check
          %p355 = pneg %p166
        $region66: #{tpu_custom_call.1} parent=47 // pred_check_branch
          %357 = sbr.rel (%p355) target = $region68
        $region67: #{tpu_custom_call.1} parent=47 // pred_region
          %359 = dma.done [#allocation10], 2048
        $region68: #{tpu_custom_call.1} parent=47 // pred_fallthru
          _
        %s360 = sand.u32 %s48, 1
        %s361 = scalar_lea.sflag [#allocation4], %s360
        %s362 = sand.u32 %s48, 1
        %s363 = smul.addr %s362, 16
        %s364 = scalar_lea.vmem [#allocation3], %s363
        %p365 = pneg %p61
        %p366 = pneg %p58
        %p367 = pneg %p82
        %p368 = pneg %p79
        %p369 = pneg %p103
        %p370 = pneg %p100
        %p371 = pneg %p124
        %p372 = pneg %p121
        %p373 = pneg %p145
        %p374 = pneg %p142
        %p375 = pneg %p166
        %p376 = pneg %p163
        %p377 = pneg %p187
        %p378 = pneg %p184
        %p379 = pneg %p213
        %p380 = pneg %p210
        %s381 = sand.u32 %s200, 1
        %s382 = scalar_lea.sflag [#allocation5], %s381
        %s383 = sand.u32 %s200, 1
        %s384 = smul.addr %s383, 16
        %s385 = scalar_lea.vmem [#allocation12], %s384
        %s386 = smul.u32 2, %s30
        %s387 = ssub.s32 3, %s386
        %p388 = scmp.lt.s32.totalorder %s387, 2
        %s389 = scalar_select %p388, %s387, 2
        %s390 = smul.u32 8, %s389
        %s391 = smul.u32 2, %s30
        %s392 = ssub.s32 3, %s391
        %p393 = scmp.lt.s32.totalorder %s392, 2
        %s394 = scalar_select %p393, %s392, 2
        %s395 = smul.u32 8, %s394
        %p396 = scmp.eq.s32.totalorder %s31, 0
        // Predicated region
        $region69: #{tpu_custom_call.1} parent=47 // pred_check
          %p397 = pneg %p396
        $region70: #{tpu_custom_call.1} parent=47 // pred_check_branch
          %399 = sbr.rel (%p397) target = $region72
        $region71: #{tpu_custom_call.1} parent=47 // pred_region
          %v400 = vld [vmem:[#allocation8] sm:$0x3]
          %v402 = vperm.slane %v400, 0
          %v403 = vperm.slane %v400, 1
          %406 = vst [vmem:[#allocation2] sm:$0xff] %v402
          %407 = vst [vmem:[#allocation2 + $0x8] sm:$0xff] %v403
          %408 = vst [vmem:[#allocation2 + $0x10] sm:$0xff] %v402
          %409 = vst [vmem:[#allocation2 + $0x18] sm:$0xff] %v403
        $region72: #{tpu_custom_call.1} parent=47 // pred_fallthru
          _
        %v410 = vld [vmem:[%s334] sm:$0xff]
        %v411 = vld [vmem:[%s334 + $0x8] sm:$0xff]
        %s412 = smul.u32 %s31, 128
        %v413 = vlaneseq
        %v414 = vand.u32 %v413, 127
        %v415 = vstv %s412
        %v416 = vadd.s32 %v415, %v414
        %vm417 = vcmp.lt.s32.totalorder %v416, 200
        %v418 = vsel %vm417, %v410, 0.0
        %v419 = vsel %vm417, %v411, 0.0
        %s420 = sshra.s32 %s412, 3
        %s421 = sand.u32 %s412, 7
        %s422 = smul.u32 %s420, 2
        %s423 = smul.addr %s422, 8
        %s424 = scalar_lea.vmem [#allocation6], %s423
        %v425 = vld [vmem:[%s424] sm:$0xff]
        %v426 = vld [vmem:[%s424 + $0x8] sm:$0xff]
        %v427 = vld [vmem:[%s424 + $0x10] sm:$0xff]
        %v428 = vld [vmem:[%s424 + $0x18] sm:$0xff]
        %v429 = vld [vmem:[%s424 + $0x20] sm:$0xff]
        %v430 = vld [vmem:[%s424 + $0x28] sm:$0xff]
        %v431 = vld [vmem:[%s424 + $0x30] sm:$0xff]
        %v432 = vld [vmem:[%s424 + $0x38] sm:$0xff]
        %v433 = vld [vmem:[%s424 + $0x40] sm:$0xff]
        %v434 = vld [vmem:[%s424 + $0x48] sm:$0xff]
        %v435 = vld [vmem:[%s424 + $0x50] sm:$0xff]
        %v436 = vld [vmem:[%s424 + $0x58] sm:$0xff]
        %v437 = vld [vmem:[%s424 + $0x60] sm:$0xff]
        %v438 = vld [vmem:[%s424 + $0x68] sm:$0xff]
        %v439 = vld [vmem:[%s424 + $0x70] sm:$0xff]
        %v440 = vld [vmem:[%s424 + $0x78] sm:$0xff]
        %v441 = vld [vmem:[%s424 + $0x80] sm:$0xff]
        %v442 = vld [vmem:[%s424 + $0x88] sm:$0xff]
        %v443 = vld [vmem:[%s424 + $0x90] sm:$0xff]
        %v444 = vld [vmem:[%s424 + $0x98] sm:$0xff]
        %v445 = vld [vmem:[%s424 + $0xa0] sm:$0xff]
        %v446 = vld [vmem:[%s424 + $0xa8] sm:$0xff]
        %v447 = vld [vmem:[%s424 + $0xb0] sm:$0xff]
        %v448 = vld [vmem:[%s424 + $0xb8] sm:$0xff]
        %v449 = vld [vmem:[%s424 + $0xc0] sm:$0xff]
        %v450 = vld [vmem:[%s424 + $0xc8] sm:$0xff]
        %v451 = vld [vmem:[%s424 + $0xd0] sm:$0xff]
        %v452 = vld [vmem:[%s424 + $0xd8] sm:$0xff]
        %v453 = vld [vmem:[%s424 + $0xe0] sm:$0xff]
        %v454 = vld [vmem:[%s424 + $0xe8] sm:$0xff]
        %v455 = vld [vmem:[%s424 + $0xf0] sm:$0xff]
        %v456 = vld [vmem:[%s424 + $0xf8] sm:$0xff]
        %v457 = vld [vmem:[#allocation2] sm:$0xff]
        %v458 = vld [vmem:[#allocation2 + $0x8] sm:$0xff]
        %v459 = vld [vmem:[#allocation2 + $0x10] sm:$0xff]
        %v460 = vld [vmem:[#allocation2 + $0x18] sm:$0xff]
        %461 = vmatpush.msra.mxu0 %v455
        %462 = vmatpush.msra.mxu0 %v453
        %463 = vmatpush.msra.mxu0 %v451
        %464 = vmatpush.msra.mxu0 %v449
        %465 = vmatpush.msra.mxu0 %v447
        %466 = vmatpush.msra.mxu0 %v445
        %467 = vmatpush.msra.mxu0 %v443
        %468 = vmatpush.msra.mxu0 %v441
        %469 = vmatpush.msra.mxu0 %v439
        %470 = vmatpush.msra.mxu0 %v437
        %471 = vmatpush.msra.mxu0 %v435
        %472 = vmatpush.msra.mxu0 %v433
        %473 = vmatpush.msra.mxu0 %v431
        %474 = vmatpush.msra.mxu0 %v429
        %475 = vmatpush.msra.mxu0 %v427
        %476 = vmatpush.msra.mxu0 %v425
        %477 = vmatmul.f32.gmra.mxu0 %v418
        %v478 = vpop.f32.mrf.mxu0
        %v479 = vadd.f32 0.0, %v478
        %480 = vmatmul.f32.gmra.mxu0 %v419
        %v481 = vpop.f32.mrf.mxu0
        %v482 = vadd.f32 0.0, %v481
        %483 = vdwg.mxu0
        %484 = vmatpush.msra.mxu0 %v456
        %485 = vmatpush.msra.mxu0 %v454
        %486 = vmatpush.msra.mxu0 %v452
        %487 = vmatpush.msra.mxu0 %v450
        %488 = vmatpush.msra.mxu0 %v448
        %489 = vmatpush.msra.mxu0 %v446
        %490 = vmatpush.msra.mxu0 %v444
        %491 = vmatpush.msra.mxu0 %v442
        %492 = vmatpush.msra.mxu0 %v440
        %493 = vmatpush.msra.mxu0 %v438
        %494 = vmatpush.msra.mxu0 %v436
        %495 = vmatpush.msra.mxu0 %v434
        %496 = vmatpush.msra.mxu0 %v432
        %497 = vmatpush.msra.mxu0 %v430
        %498 = vmatpush.msra.mxu0 %v428
        %499 = vmatpush.msra.mxu0 %v426
        %500 = vmatmul.f32.gmra.mxu0 %v418
        %v501 = vpop.f32.mrf.mxu0
        %v502 = vadd.f32 0.0, %v501
        %503 = vmatmul.f32.gmra.mxu0 %v419
        %v504 = vpop.f32.mrf.mxu0
        %v505 = vadd.f32 0.0, %v504
        %506 = vdwg.mxu0
        %v507 = vadd.f32 %v457, %v479
        %v508 = vadd.f32 %v458, %v502
        %v509 = vadd.f32 %v459, %v482
        %v510 = vadd.f32 %v460, %v505
        %511 = vst [vmem:[#allocation2] sm:$0xff] %v507
        %512 = vst [vmem:[#allocation2 + $0x8] sm:$0xff] %v508
        %513 = vst [vmem:[#allocation2 + $0x10] sm:$0xff] %v509
        %514 = vst [vmem:[#allocation2 + $0x18] sm:$0xff] %v510
        %p515 = scmp.eq.s32.totalorder %s31, 1
        // Predicated region
        $region73: #{tpu_custom_call.1} parent=47 // pred_check
          %p516 = pneg %p515
        $region74: #{tpu_custom_call.1} parent=47 // pred_check_branch
          %518 = sbr.rel (%p516) target = $region76
        $region75: #{tpu_custom_call.1} parent=47 // pred_region
          %v519 = vld [vmem:[#allocation2] sm:$0xff]
          %v520 = vld [vmem:[#allocation2 + $0x8] sm:$0xff]
          %v521 = vld [vmem:[#allocation2 + $0x10] sm:$0xff]
          %v522 = vld [vmem:[#allocation2 + $0x18] sm:$0xff]
          %vm523 = vcmp.gt.f32.partialorder %v519, 0.0
          %vm524 = vcmp.gt.f32.partialorder %v520, 0.0
          %vm525 = vcmp.gt.f32.partialorder %v521, 0.0
          %vm526 = vcmp.gt.f32.partialorder %v522, 0.0
          %v527 = vmul.f32 %v519, 0.2
          %v528 = vmul.f32 %v520, 0.2
          %v529 = vmul.f32 %v521, 0.2
          %v530 = vmul.f32 %v522, 0.2
          %v531 = vsel %vm523, %v519, %v527
          %v532 = vsel %vm524, %v520, %v528
          %v533 = vsel %vm525, %v521, %v529
          %v534 = vsel %vm526, %v522, %v530
          %v535 = vld [vmem:[#allocation9] sm:$0xff]
          %v536 = vld [vmem:[#allocation9 + $0x8] sm:$0xff]
          %v537 = vld [vmem:[#allocation9 + $0x10] sm:$0xff]
          %v538 = vld [vmem:[#allocation9 + $0x18] sm:$0xff]
          %v539 = vld [vmem:[#allocation9 + $0x20] sm:$0xff]
          %v540 = vld [vmem:[#allocation9 + $0x28] sm:$0xff]
          %v541 = vld [vmem:[#allocation9 + $0x30] sm:$0xff]
          %v542 = vld [vmem:[#allocation9 + $0x38] sm:$0xff]
          %v543 = vld [vmem:[#allocation9 + $0x40] sm:$0xff]
          %v544 = vld [vmem:[#allocation9 + $0x48] sm:$0xff]
          %v545 = vld [vmem:[#allocation9 + $0x50] sm:$0xff]
          %v546 = vld [vmem:[#allocation9 + $0x58] sm:$0xff]
          %v547 = vld [vmem:[#allocation9 + $0x60] sm:$0xff]
          %v548 = vld [vmem:[#allocation9 + $0x68] sm:$0xff]
          %v549 = vld [vmem:[#allocation9 + $0x70] sm:$0xff]
          %v550 = vld [vmem:[#allocation9 + $0x78] sm:$0xff]
          %v551 = vld [vmem:[#allocation9 + $0x80] sm:$0xff]
          %v552 = vld [vmem:[#allocation9 + $0x88] sm:$0xff]
          %v553 = vld [vmem:[#allocation9 + $0x90] sm:$0xff]
          %v554 = vld [vmem:[#allocation9 + $0x98] sm:$0xff]
          %v555 = vld [vmem:[#allocation9 + $0xa0] sm:$0xff]
          %v556 = vld [vmem:[#allocation9 + $0xa8] sm:$0xff]
          %v557 = vld [vmem:[#allocation9 + $0xb0] sm:$0xff]
          %v558 = vld [vmem:[#allocation9 + $0xb8] sm:$0xff]
          %v559 = vld [vmem:[#allocation9 + $0xc0] sm:$0xff]
          %v560 = vld [vmem:[#allocation9 + $0xc8] sm:$0xff]
          %v561 = vld [vmem:[#allocation9 + $0xd0] sm:$0xff]
          %v562 = vld [vmem:[#allocation9 + $0xd8] sm:$0xff]
          %v563 = vld [vmem:[#allocation9 + $0xe0] sm:$0xff]
          %v564 = vld [vmem:[#allocation9 + $0xe8] sm:$0xff]
          %v565 = vld [vmem:[#allocation9 + $0xf0] sm:$0xff]
          %v566 = vld [vmem:[#allocation9 + $0xf8] sm:$0xff]
          %v567 = vld [vmem:[%s4] sm:$0x1]
          %v569 = vperm.slane %v567, 0
          %571 = vmatpush.msra.mxu0 %v550
          %572 = vmatpush.msra.mxu0 %v549
          %573 = vmatpush.msra.mxu0 %v548
          %574 = vmatpush.msra.mxu0 %v547
          %575 = vmatpush.msra.mxu0 %v546
          %576 = vmatpush.msra.mxu0 %v545
          %577 = vmatpush.msra.mxu0 %v544
          %578 = vmatpush.msra.mxu0 %v543
          %579 = vmatpush.msra.mxu0 %v542
          %580 = vmatpush.msra.mxu0 %v541
          %581 = vmatpush.msra.mxu0 %v540
          %582 = vmatpush.msra.mxu0 %v539
          %583 = vmatpush.msra.mxu0 %v538
          %584 = vmatpush.msra.mxu0 %v537
          %585 = vmatpush.msra.mxu0 %v536
          %586 = vmatpush.msra.mxu0 %v535
          %587 = vmatmul.f32.gmra.mxu0 %v531
          %v588 = vpop.f32.mrf.mxu0
          %v589 = vadd.f32 %v569, %v588
          %590 = vmatmul.f32.gmra.mxu0 %v533
          %v591 = vpop.f32.mrf.mxu0
          %v592 = vadd.f32 %v569, %v591
          %593 = vdwg.mxu0
          %594 = vmatpush.msra.mxu0 %v566
          %595 = vmatpush.msra.mxu0 %v565
          %596 = vmatpush.msra.mxu0 %v564
          %597 = vmatpush.msra.mxu0 %v563
          %598 = vmatpush.msra.mxu0 %v562
          %599 = vmatpush.msra.mxu0 %v561
          %600 = vmatpush.msra.mxu0 %v560
          %601 = vmatpush.msra.mxu0 %v559
          %602 = vmatpush.msra.mxu0 %v558
          %603 = vmatpush.msra.mxu0 %v557
          %604 = vmatpush.msra.mxu0 %v556
          %605 = vmatpush.msra.mxu0 %v555
          %606 = vmatpush.msra.mxu0 %v554
          %607 = vmatpush.msra.mxu0 %v553
          %608 = vmatpush.msra.mxu0 %v552
          %609 = vmatpush.msra.mxu0 %v551
          %610 = vmatmul.f32.gmra.mxu0 %v532
          %v611 = vpop.f32.mrf.mxu0
          %v612 = vadd.f32 %v589, %v611
          %613 = vmatmul.f32.gmra.mxu0 %v534
          %v614 = vpop.f32.mrf.mxu0
          %v615 = vadd.f32 %v592, %v614
          %616 = vdwg.mxu0
          %vm617 = vcmp.gt.f32.partialorder %v612, 0.0
          %vm618 = vcmp.gt.f32.partialorder %v615, 0.0
          %v619 = vmul.f32 %v612, 0.2
          %v620 = vmul.f32 %v615, 0.2
          %v621 = vsel %vm617, %v612, %v619
          %v622 = vsel %vm618, %v615, %v620
          %v623 = vld [vmem:[#allocation11] sm:$0xff]
          %v624 = vld [vmem:[#allocation11 + $0x8] sm:$0xff]
          %v625 = vld [vmem:[#allocation11 + $0x10] sm:$0xff]
          %v626 = vld [vmem:[#allocation11 + $0x18] sm:$0xff]
          %v627 = vld [vmem:[#allocation11 + $0x20] sm:$0xff]
          %v628 = vld [vmem:[#allocation11 + $0x28] sm:$0xff]
          %v629 = vld [vmem:[#allocation11 + $0x30] sm:$0xff]
          %v630 = vld [vmem:[#allocation11 + $0x38] sm:$0xff]
          %v631 = vld [vmem:[#allocation11 + $0x40] sm:$0xff]
          %v632 = vld [vmem:[#allocation11 + $0x48] sm:$0xff]
          %v633 = vld [vmem:[#allocation11 + $0x50] sm:$0xff]
          %v634 = vld [vmem:[#allocation11 + $0x58] sm:$0xff]
          %v635 = vld [vmem:[#allocation11 + $0x60] sm:$0xff]
          %v636 = vld [vmem:[#allocation11 + $0x68] sm:$0xff]
          %v637 = vld [vmem:[#allocation11 + $0x70] sm:$0xff]
          %v638 = vld [vmem:[#allocation11 + $0x78] sm:$0xff]
          %v639 = vld [vmem:[%s6] sm:$0x1]
          %v641 = vperm.slane %v639, 0
          %643 = vmatpush.msra.mxu0 %v638
          %644 = vmatpush.msra.mxu0 %v637
          %645 = vmatpush.msra.mxu0 %v636
          %646 = vmatpush.msra.mxu0 %v635
          %647 = vmatpush.msra.mxu0 %v634
          %648 = vmatpush.msra.mxu0 %v633
          %649 = vmatpush.msra.mxu0 %v632
          %650 = vmatpush.msra.mxu0 %v631
          %651 = vmatpush.msra.mxu0 %v630
          %652 = vmatpush.msra.mxu0 %v629
          %653 = vmatpush.msra.mxu0 %v628
          %654 = vmatpush.msra.mxu0 %v627
          %655 = vmatpush.msra.mxu0 %v626
          %656 = vmatpush.msra.mxu0 %v625
          %657 = vmatpush.msra.mxu0 %v624
          %658 = vmatpush.msra.mxu0 %v623
          %659 = vmatmul.f32.gmra.mxu0 %v621
          %v660 = vpop.f32.mrf.mxu0
          %v661 = vadd.f32 %v641, %v660
          %662 = vmatmul.f32.gmra.mxu0 %v622
          %v663 = vpop.f32.mrf.mxu0
          %v664 = vadd.f32 %v641, %v663
          %665 = vdwg.mxu0
          %666 = vst [vmem:[%s385] sm:$0xff] %v661
          %667 = vst [vmem:[%s385 + $0x8] sm:$0xff] %v664
        $region76: #{tpu_custom_call.1} parent=47 // pred_fallthru
          _
        %s668 = sand.u32 %s200, 1
        %s669 = scalar_lea.sflag [#allocation5], %s668
        %s670 = sand.u32 %s200, 1
        %s671 = smul.addr %s670, 16
        %s672 = scalar_lea.vmem [#allocation12], %s671
        // Predicated region
        $region77: #{tpu_custom_call.1} parent=47 // pred_check
          %p673 = pneg %p210
        $region78: #{tpu_custom_call.1} parent=47 // pred_check_branch
          %675 = sbr.rel (%p673) target = $region80
        $region79: #{tpu_custom_call.1} parent=47 // pred_region
          %s676 = smul.u32 2, %s30
          %s677 = ssub.s32 3, %s676
          %p678 = scmp.lt.s32.totalorder %s677, 2
          %s679 = scalar_select %p678, %s677, 2
          %s680 = smul.u32 8, %s679
          %s681 = ssub.s32 16, %s680
          %s682 = sshll.u32 %s681, 4
          %683 = vsyncadd %s669, %s682
          %p684 = scmp.ne.s32.totalorder 0, %s680
          %s685 = smul.addr %s676, 8
          %s686 = scalar_lea.hbm %s7, %s685
          %s687 = smul.u32 8, %s679
          %s688 = sshll.u32 %s672, 4
          %s689 = int_to_ptr.vmem [resolvable:$true] %s688
          %s690 = sshll.u32 %s686, 4
          %s691 = int_to_ptr.hbm [resolvable:$true] %s690
          %s692 = sshll.u32 %s687, 4
          %696 = dma.vmem_to_hbm [thread:$0]  (%p684), %s689, %s692, %s691, %s669, 128, 128, 8
        $region80: #{tpu_custom_call.1} parent=47 // pred_fallthru
          _
      $region48: #{tpu_custom_call.1} parent=5 // pred_fallthru
        _
      %p697 = scmp.le.s32.totalorder 2, %s21
      // Predicated region
      $region81: #{tpu_custom_call.1} parent=5 // pred_check
        %p698 = pneg %p697
      $region82: #{tpu_custom_call.1} parent=5 // pred_check_branch
        %700 = sbr.rel (%p698) target = $region84
      $region83: #{tpu_custom_call.1} parent=5 // pred_region
        %s701 = ssub.s32 %s21, 2
        // Predicated region
        $region85: #{tpu_custom_call.1} parent=83 // pred_check
          %p702 = pneg %p216
        $region86: #{tpu_custom_call.1} parent=83 // pred_check_branch
          %704 = sbr.rel (%p702) target = $region88
        $region87: #{tpu_custom_call.1} parent=83 // pred_region
          %s705 = sand.u32 %s201, 1
          %s706 = scalar_lea.sflag [#allocation5], %s705
          %s707 = sand.u32 %s201, 1
          %s708 = smul.addr %s707, 16
          %s709 = scalar_lea.vmem [#allocation12], %s708
          %711 = dma.done %s706, 256
        $region88: #{tpu_custom_call.1} parent=83 // pred_fallthru
          _
      $region84: #{tpu_custom_call.1} parent=5 // pred_fallthru
        _
    $region6: #{tpu_custom_call.1} parent=1 // loop_footer
      %s25 = sadd.s32 1, %s21
    $region7: #{tpu_custom_call.1} parent=1 // loop_footer_branch
      %20 = sbr.rel target = $region3
    $region8: #{tpu_custom_call.1} parent=1 // loop_exit
      _
    %712 = vsyncpa [#allocation4], 1
    %s713 = scalar_lea.sflag [#allocation4], 1
    %714 = vsyncpa %s713, 1
    %715 = vsyncpa [#allocation7], 1
    %716 = vsyncpa [#allocation10], 1
    %717 = vsyncpa [#allocation5], 1
    %s718 = scalar_lea.sflag [#allocation5], 1
    %719 = vsyncpa %s718, 1

</llo_original>
